<compile_context>
chip_gen: v7x
topology: tpu7x:2x2x1
jax: 0.10.0
libtpu: 0.0.40
codegen_flags: <defaults>
</compile_context>

<pallas_src>
from typing import List, Sequence

import jax
import jax.numpy as jnp
from jax.experimental import pallas as pl
from jax.experimental.pallas import tpu as pltpu


class TensorList:
    """JAX analogue of the PyTorch TensorList container."""

    def __init__(self, tlist: List[jax.Array]):
        self.tlist = list(tlist)

    def __getitem__(self, idx):
        return self.tlist[idx]

    def __iter__(self):
        return self.tlist.__iter__()

    def __len__(self):
        return len(self.tlist)

    def detach(self):
        return TensorList([jax.lax.stop_gradient(t) for t in self.tlist])


# ----------------------------------------------------------------------------
# Pallas kernel (only used when materialize=True): batched HBM->HBM DMA copy.
# ----------------------------------------------------------------------------
def _batched_hbm_copy_kernel(*refs):
    """refs = (in_0..in_{n-1}, out_0..out_{n-1}, sem).

    Pure DMA identity: start every HBM->HBM copy, then wait on all of them so
    the transfers overlap and the copy runs at the HBM roofline with zero
    VMEM/VPU involvement.
    """
    sem = refs[-1]
    n = (len(refs) - 1) // 2
    copies = [
        pltpu.make_async_copy(refs[i], refs[n + i], sem.at[i]) for i in range(n)
    ]
    for cp in copies:   # issue all DMAs first ...
        cp.start()
    for cp in copies:   # ... then drain them.
        cp.wait()


def _batched_identity(tensors: List[jax.Array]) -> List[jax.Array]:
    """One pallas_call copying every tensor HBM->HBM via async DMA."""
    n = len(tensors)
    out = pl.pallas_call(
        _batched_hbm_copy_kernel,
        out_shape=[jax.ShapeDtypeStruct(t.shape, t.dtype) for t in tensors],
        in_specs=[pl.BlockSpec(memory_space=pl.ANY)] * n,
        out_specs=[pl.BlockSpec(memory_space=pl.ANY)] * n,
        scratch_shapes=[pltpu.SemaphoreType.DMA((n,))],
    )(*tensors)
    return list(out)


# ----------------------------------------------------------------------------
# Module
# ----------------------------------------------------------------------------
class ToTensorList:
    """JAX/Pallas analogue of the PyTorch ToTensorList module.

    forward(x): sequence of arrays -> TensorList of arrays with identical
    values / shapes / dtypes.

    materialize=False (default, matches PyTorch exactly): pure container wrap,
    no data movement.  materialize=True: every tensor is copied into a fresh
    buffer by a single batched Pallas HBM->HBM DMA kernel.
    """

    def __init__(self, materialize: bool = False):
        self.materialize = materialize

    def __call__(self, x: Sequence[jax.Array]) -> TensorList:
        return self.forward(x)

    def forward(self, x: Sequence[jax.Array]) -> TensorList:
        tensors = list(x)
        if not self.materialize or not tensors:
            # Semantically identical to the PyTorch module: just wrap the list.
            return TensorList(tensors)
        return TensorList(_batched_identity(tensors))


if __name__ == "__main__":
    key = jax.random.PRNGKey(0)
    k0, k1, k2, k3 = jax.random.split(key, 4)

    # Small, deterministic example inputs (heterogeneous list, as the PyTorch
    # forward implies List[torch.Tensor]).
    x0 = jax.random.normal(k0, (2, 4, 16, 16), dtype=jnp.float32)   # NCHW-style
    x1 = jax.random.normal(k1, (2, 8, 32), dtype=jnp.float32)       # (batch, seq, hidden)
    x2 = jax.random.normal(k2, (4, 32), dtype=jnp.bfloat16)         # (rows, hidden)
    x3 = jax.random.normal(k3, (2056, 128), dtype=jnp.float32)      # larger tensor

    inputs = [x0, x1, x2, x3]

    # 1) Default path: exact PyTorch semantics — pure container wrap (no kernel,
    #    no HBM traffic).
    wrap = ToTensorList()(inputs)
    assert len(wrap) == len(inputs)
    for inp, res in zip(inputs, wrap):
        assert res is inp  # same arrays, zero-cost

    # 2) Materialized path: single batched Pallas HBM->HBM DMA copy, bit-exact.
    out = ToTensorList(materialize=True)(inputs)
    for t in out:
        jax.block_until_ready(t)

    assert len(out) == len(inputs)
    for inp, res in zip(inputs, out):
        assert res.shape == inp.shape
        assert res.dtype == inp.dtype
        assert bool(jnp.all(res == inp))

    # detach() analogue works too.
    _ = out.detach()

    print("KERNEL_OK")
</pallas_src>

<mosaic_0001>
module attributes {stable_mosaic.version = 11 : i64} {
  func.func @_batched_hbm_copy_kernel(%arg0: memref<2x4x16x16xf32, #tpu.memory_space<any>>, %arg1: memref<2x8x32xf32, #tpu.memory_space<any>>, %arg2: memref<4x32xbf16, #tpu.memory_space<any>>, %arg3: memref<2056x128xf32, #tpu.memory_space<any>>, %arg4: memref<2x4x16x16xf32, #tpu.memory_space<any>>, %arg5: memref<2x8x32xf32, #tpu.memory_space<any>>, %arg6: memref<4x32xbf16, #tpu.memory_space<any>>, %arg7: memref<2056x128xf32, #tpu.memory_space<any>>, %arg8: memref<4x!tpu.dma_semaphore, #tpu.memory_space<semaphore_mem>>) attributes {dimension_semantics = [], scalar_prefetch = 0 : i64, scratch_operands = 1 : i64, tpu.core_type = #tpu.core_type<tc>} {
    %c0_i32 = arith.constant 0 : i32
    %0 = tpu.memref_slice %arg8[%c0_i32] : memref<4x!tpu.dma_semaphore, #tpu.memory_space<semaphore_mem>> -> memref<1x!tpu.dma_semaphore, #tpu.memory_space<semaphore_mem>>
    %1 = tpu.memref_squeeze %0 : memref<1x!tpu.dma_semaphore, #tpu.memory_space<semaphore_mem>> -> memref<!tpu.dma_semaphore, #tpu.memory_space<semaphore_mem>>
    tpu.enqueue_dma source(%arg0 : memref<2x4x16x16xf32, #tpu.memory_space<any>>) target(%arg4 : memref<2x4x16x16xf32, #tpu.memory_space<any>>) target_semaphore(%1 : memref<!tpu.dma_semaphore, #tpu.memory_space<semaphore_mem>>)
    %c1_i32 = arith.constant 1 : i32
    %2 = tpu.memref_slice %arg8[%c1_i32] : memref<4x!tpu.dma_semaphore, #tpu.memory_space<semaphore_mem>> -> memref<1x!tpu.dma_semaphore, #tpu.memory_space<semaphore_mem>>
    %3 = tpu.memref_squeeze %2 : memref<1x!tpu.dma_semaphore, #tpu.memory_space<semaphore_mem>> -> memref<!tpu.dma_semaphore, #tpu.memory_space<semaphore_mem>>
    tpu.enqueue_dma source(%arg1 : memref<2x8x32xf32, #tpu.memory_space<any>>) target(%arg5 : memref<2x8x32xf32, #tpu.memory_space<any>>) target_semaphore(%3 : memref<!tpu.dma_semaphore, #tpu.memory_space<semaphore_mem>>)
    %c2_i32 = arith.constant 2 : i32
    %4 = tpu.memref_slice %arg8[%c2_i32] : memref<4x!tpu.dma_semaphore, #tpu.memory_space<semaphore_mem>> -> memref<1x!tpu.dma_semaphore, #tpu.memory_space<semaphore_mem>>
    %5 = tpu.memref_squeeze %4 : memref<1x!tpu.dma_semaphore, #tpu.memory_space<semaphore_mem>> -> memref<!tpu.dma_semaphore, #tpu.memory_space<semaphore_mem>>
    tpu.enqueue_dma source(%arg2 : memref<4x32xbf16, #tpu.memory_space<any>>) target(%arg6 : memref<4x32xbf16, #tpu.memory_space<any>>) target_semaphore(%5 : memref<!tpu.dma_semaphore, #tpu.memory_space<semaphore_mem>>)
    %c3_i32 = arith.constant 3 : i32
    %6 = tpu.memref_slice %arg8[%c3_i32] : memref<4x!tpu.dma_semaphore, #tpu.memory_space<semaphore_mem>> -> memref<1x!tpu.dma_semaphore, #tpu.memory_space<semaphore_mem>>
    %7 = tpu.memref_squeeze %6 : memref<1x!tpu.dma_semaphore, #tpu.memory_space<semaphore_mem>> -> memref<!tpu.dma_semaphore, #tpu.memory_space<semaphore_mem>>
    tpu.enqueue_dma source(%arg3 : memref<2056x128xf32, #tpu.memory_space<any>>) target(%arg7 : memref<2056x128xf32, #tpu.memory_space<any>>) target_semaphore(%7 : memref<!tpu.dma_semaphore, #tpu.memory_space<semaphore_mem>>)
    %c0_i32_0 = arith.constant 0 : i32
    %8 = tpu.memref_slice %arg8[%c0_i32_0] : memref<4x!tpu.dma_semaphore, #tpu.memory_space<semaphore_mem>> -> memref<1x!tpu.dma_semaphore, #tpu.memory_space<semaphore_mem>>
    %9 = tpu.memref_squeeze %8 : memref<1x!tpu.dma_semaphore, #tpu.memory_space<semaphore_mem>> -> memref<!tpu.dma_semaphore, #tpu.memory_space<semaphore_mem>>
    tpu.wait_dma2 semaphore(%9 : memref<!tpu.dma_semaphore, #tpu.memory_space<semaphore_mem>>) src(%arg0 : memref<2x4x16x16xf32, #tpu.memory_space<any>>) dst(%arg4 : memref<2x4x16x16xf32, #tpu.memory_space<any>>)
    %c1_i32_1 = arith.constant 1 : i32
    %10 = tpu.memref_slice %arg8[%c1_i32_1] : memref<4x!tpu.dma_semaphore, #tpu.memory_space<semaphore_mem>> -> memref<1x!tpu.dma_semaphore, #tpu.memory_space<semaphore_mem>>
    %11 = tpu.memref_squeeze %10 : memref<1x!tpu.dma_semaphore, #tpu.memory_space<semaphore_mem>> -> memref<!tpu.dma_semaphore, #tpu.memory_space<semaphore_mem>>
    tpu.wait_dma2 semaphore(%11 : memref<!tpu.dma_semaphore, #tpu.memory_space<semaphore_mem>>) src(%arg1 : memref<2x8x32xf32, #tpu.memory_space<any>>) dst(%arg5 : memref<2x8x32xf32, #tpu.memory_space<any>>)
    %c2_i32_2 = arith.constant 2 : i32
    %12 = tpu.memref_slice %arg8[%c2_i32_2] : memref<4x!tpu.dma_semaphore, #tpu.memory_space<semaphore_mem>> -> memref<1x!tpu.dma_semaphore, #tpu.memory_space<semaphore_mem>>
    %13 = tpu.memref_squeeze %12 : memref<1x!tpu.dma_semaphore, #tpu.memory_space<semaphore_mem>> -> memref<!tpu.dma_semaphore, #tpu.memory_space<semaphore_mem>>
    tpu.wait_dma2 semaphore(%13 : memref<!tpu.dma_semaphore, #tpu.memory_space<semaphore_mem>>) src(%arg2 : memref<4x32xbf16, #tpu.memory_space<any>>) dst(%arg6 : memref<4x32xbf16, #tpu.memory_space<any>>)
    %c3_i32_3 = arith.constant 3 : i32
    %14 = tpu.memref_slice %arg8[%c3_i32_3] : memref<4x!tpu.dma_semaphore, #tpu.memory_space<semaphore_mem>> -> memref<1x!tpu.dma_semaphore, #tpu.memory_space<semaphore_mem>>
    %15 = tpu.memref_squeeze %14 : memref<1x!tpu.dma_semaphore, #tpu.memory_space<semaphore_mem>> -> memref<!tpu.dma_semaphore, #tpu.memory_space<semaphore_mem>>
    tpu.wait_dma2 semaphore(%15 : memref<!tpu.dma_semaphore, #tpu.memory_space<semaphore_mem>>) src(%arg3 : memref<2056x128xf32, #tpu.memory_space<any>>) dst(%arg7 : memref<2056x128xf32, #tpu.memory_space<any>>)
    return
  }
}

</mosaic_0001>

<llo_original>
// kernel: tpu_custom_call.1
$region0: #{tpu_custom_call.1}
  #allocation0 [shape = 'u32[]', space=smem, size = 0x4, offset = 0x4, fixed_abs, tag = 'smem constant byte address 0x4 - core index']
  #allocation1 [shape = 'u32[144,128]{1,0:T(1,128)}', space=vmem, size = 0x12000, scoped, tag = 'internal scratch']
  #allocation2 [shape = 's32[4]{0}', space=sflag, size = 0x10, scoped, tag = 'scratch operand']
  #allocation3 [shape = 's32[]', space=sflag, size = 0x4, offset = 0, fixed_abs, tag = 'sflag constant byte address 0x0 - dummy sync flag']
  #allocation4 [shape = 'u32[0]{0}', space=smem, size = 0, offset = 0, fixed_abs, tag = 'smem constant byte address 0x0 - null']
  #allocation5 [shape = 's32[]', space=sflag, size = 0x4, offset = 0, fixed_abs, tag = 'sflag constant byte address 0x0 - dummy sync flag']
  #allocation6 [shape = 'u32[0]{0}', space=smem, size = 0, offset = 0, fixed_abs, tag = 'smem constant byte address 0x0 - null']
  #allocation7 [shape = 's32[]', space=sflag, size = 0x4, offset = 0, fixed_abs, tag = 'sflag constant byte address 0x0 - dummy sync flag']
  #allocation8 [shape = 'u32[0]{0}', space=smem, size = 0, offset = 0, fixed_abs, tag = 'smem constant byte address 0x0 - null']
  #allocation9 [shape = 's32[]', space=sflag, size = 0x4, offset = 0, fixed_abs, tag = 'sflag constant byte address 0x0 - dummy sync flag']
  #allocation10 [shape = 'u32[0]{0}', space=smem, size = 0, offset = 0, fixed_abs, tag = 'smem constant byte address 0x0 - null']
  %s0 = inlined_call_operand.hbm [shape: f32[2,4,16,16], index: 0, kind: input, shape index: {}]
  %s1 = inlined_call_operand.hbm [shape: f32[2,8,32], index: 1, kind: input, shape index: {}]
  %s2 = inlined_call_operand.hbm [shape: bf16[4,32], index: 2, kind: input, shape index: {}]
  %s3 = inlined_call_operand.hbm [shape: f32[2056,128], index: 3, kind: input, shape index: {}]
  %s4 = inlined_call_operand.hbm [shape: f32[2,4,16,16], index: 4, kind: output, shape index: {0}]
  %s5 = inlined_call_operand.hbm [shape: f32[2,8,32], index: 5, kind: output, shape index: {1}]
  %s6 = inlined_call_operand.hbm [shape: bf16[4,32], index: 6, kind: output, shape index: {2}]
  %s7 = inlined_call_operand.hbm [shape: f32[2056,128], index: 7, kind: output, shape index: {3}]
  %8 = xla_tuple %s4, %s5, %s6, %s7
  %s9 = sld [smem:[#allocation0]]
  $region2: #{tpu_custom_call.1} parent=0
    _
  %s11 = ssub.s32 1, %s9
  %s12 = scalar_select 0, %s11, %s9
  %s14 = sshll.u32 1, 14
  %s15 = sxor.u32 4294967295, %s14
  %s18 = sshll.u32 3, 24
  %s19 = sxor.u32 4294967295, %s18
  %s20 = sand.u32 0, %s19
  %s22 = sor.u32 %s20, 0
  %25 = dma.general %s0, 2048, %s4, [#allocation2], [#allocation3], [#allocation4], %s22, 0
  %s26 = scalar_lea.sflag [#allocation2], 1
  %s28 = sshll.u32 1, 14
  %s29 = sxor.u32 4294967295, %s28
  %s32 = sshll.u32 3, 24
  %s33 = sxor.u32 4294967295, %s32
  %s34 = sand.u32 0, %s33
  %s36 = sor.u32 %s34, 0
  %39 = dma.general %s1, 256, %s5, %s26, [#allocation5], [#allocation6], %s36, 0
  %s40 = scalar_lea.sflag [#allocation2], 2
  %s42 = sshll.u32 1, 14
  %s43 = sxor.u32 4294967295, %s42
  %s46 = sshll.u32 3, 24
  %s47 = sxor.u32 4294967295, %s46
  %s48 = sand.u32 0, %s47
  %s50 = sor.u32 %s48, 0
  %53 = dma.general %s2, 32, %s6, %s40, [#allocation7], [#allocation8], %s50, 0
  %s54 = scalar_lea.sflag [#allocation2], 3
  %s56 = sshll.u32 1, 14
  %s57 = sxor.u32 4294967295, %s56
  %s60 = sshll.u32 3, 24
  %s61 = sxor.u32 4294967295, %s60
  %s62 = sand.u32 0, %s61
  %s64 = sor.u32 %s62, 0
  %67 = dma.general %s3, 32896, %s7, %s54, [#allocation9], [#allocation10], %s64, 0
  %s68 = smul.u32 2, 4
  %s69 = smul.u32 %s68, 16
  %s70 = smul.u32 %s69, 1
  %s71 = sshll.u32 %s70, 4
  %72 = dma.done [#allocation2], %s71
  %s73 = smul.u32 2, 8
  %s74 = smul.u32 %s73, 1
  %s75 = sshll.u32 %s74, 4
  %76 = dma.done %s26, %s75
  %s77 = smul.u32 2, 1
  %s78 = smul.u32 %s77, 1
  %s79 = sshll.u32 %s78, 4
  %80 = dma.done %s40, %s79
  %s81 = smul.u32 2056, 1
  %s82 = sshll.u32 %s81, 4
  %83 = dma.done %s54, %s82
  %84 = vsyncmov [#allocation2]
  %s85 = vpop.sfrf %84
  %p86 = scmp.eq.s32.totalorder %s85, 0
  %p87 = pneg %p86
  %89 = shalt.err (%p87)
  %s90 = scalar_lea.sflag [#allocation2], 1
  %91 = vsyncmov %s90
  %s92 = vpop.sfrf %91
  %p93 = scmp.eq.s32.totalorder %s92, 0
  %p94 = pneg %p93
  %96 = shalt.err (%p94)
  %s97 = scalar_lea.sflag [#allocation2], 2
  %98 = vsyncmov %s97
  %s99 = vpop.sfrf %98
  %p100 = scmp.eq.s32.totalorder %s99, 0
  %p101 = pneg %p100
  %103 = shalt.err (%p101)
  %s104 = scalar_lea.sflag [#allocation2], 3
  %105 = vsyncmov %s104
  %s106 = vpop.sfrf %105
  %p107 = scmp.eq.s32.totalorder %s106, 0
  %p108 = pneg %p107
  %110 = shalt.err (%p108)

</llo_original>
